<compile_context>
chip_gen: v7x
topology: tpu7x:2x2x1
jax: 0.10.0
libtpu: 0.0.40
codegen_flags: <defaults>
</compile_context>

<pallas_src>
import functools

import jax
import jax.numpy as jnp
from jax.experimental import pallas as pl
from jax.experimental.pallas import tpu as pltpu


# ---------------------------------------------------------------------------
# Budget / tiling helpers
# ---------------------------------------------------------------------------

def _round_down(v, m):
    """Largest multiple of m that is <= v (never below m)."""
    return max(m, (v // m) * m)


def _vmem_budget_bytes():
    """~72% of this generation's physical VMEM (conservative fallback: v7x 64 MiB)."""
    cap = 64 * 1024 * 1024
    try:
        info = pltpu.get_tpu_info()
        cap = int(getattr(info, "vmem_capacity_bytes", cap) or cap)
    except Exception:
        pass
    return int(cap * 0.72)


def _target_block_bytes(budget):
    """Per-block byte target: 1-8 MiB sweet spot, scaled with the VMEM budget."""
    return int(min(8 << 20, max(1 << 20, budget // 16)))


def _train_tile_f(batch, feat, itemsize, target_bytes, budget_bytes):
    """Feature tile for a (batch, TILE_F) block in the single-pass training path."""
    if feat <= 128:
        return feat
    cols = max(128, target_bytes // max(1, batch * itemsize))
    tile_f = feat if feat <= cols else _round_down(min(cols, feat), 128)
    # Keep double-buffered x-in + out blocks within ~half the VMEM budget.
    while tile_f > 128 and 4 * batch * tile_f * itemsize > budget_bytes // 2:
        tile_f = _round_down(tile_f // 2, 128)
    # Guarantee >= 2 grid steps so megacore (v7x, 2 TCs) can shard this axis.
    if pl.cdiv(feat, tile_f) < 2:
        tile_f = _round_down(feat // 2, 128)
    return tile_f


def _pointwise_tiles(batch, feat, itemsize, target_bytes):
    """(TILE_B, TILE_F) for the pointwise / batch-chunked passes."""
    tile_f = feat if feat <= 1024 else 1024          # lane-dense, 128-multiple
    rows = max(8, target_bytes // max(1, tile_f * itemsize))
    tile_b = batch if batch <= rows else _round_down(rows, 8)
    return tile_b, tile_f


# ---------------------------------------------------------------------------
# Kernels
# ---------------------------------------------------------------------------

def _train_fused_kernel(momentum, x_ref, rmin_ref, rmax_ref,
                        out_ref, new_rmin_ref, new_rmax_ref):
    """Single-pass training: full batch column resident, one feature tile."""
    x = x_ref[...].astype(jnp.float32)                       # (B, TILE_F)
    x_min = jnp.min(x, axis=0, keepdims=True)                # (1, TILE_F)
    x_max = jnp.max(x, axis=0, keepdims=True)                # (1, TILE_F)
    coeff = 1.0 - 2.0 * x_min                                # once per feature row
    out_ref[...] = (x * coeff + x_min).astype(out_ref.dtype)
    new_rmin_ref[...] = (momentum * rmin_ref[...].astype(jnp.float32)
                         + (1.0 - momentum) * x_min).astype(new_rmin_ref.dtype)
    new_rmax_ref[...] = (momentum * rmax_ref[...].astype(jnp.float32)
                         + (1.0 - momentum) * x_max).astype(new_rmax_ref.dtype)


def _minmax_pass_kernel(momentum, total_b, tile_b, x_ref, rmin_ref, rmax_ref,
                        xmin_ref, xmax_ref, new_rmin_ref, new_rmax_ref):
    """Two-pass training, pass 1: per-feature min/max reduced over batch tiles."""
    bi = pl.program_id(1)
    x = x_ref[...].astype(jnp.float32)                        # (TILE_B, TILE_F)
    if total_b % tile_b != 0:
        # Mask padded rows of the ragged last batch block out of the reduction.
        rows = jax.lax.broadcasted_iota(jnp.int32, x.shape, 0) + bi * tile_b
        valid = rows < total_b
        x_for_min = jnp.where(valid, x, jnp.inf)
        x_for_max = jnp.where(valid, x, -jnp.inf)
    else:
        x_for_min = x
        x_for_max = x
    cur_min = jnp.min(x_for_min, axis=0, keepdims=True)       # (1, TILE_F)
    cur_max = jnp.max(x_for_max, axis=0, keepdims=True)

    @pl.when(bi == 0)
    def _():
        xmin_ref[...] = cur_min
        xmax_ref[...] = cur_max

    @pl.when(bi != 0)
    def _():
        xmin_ref[...] = jnp.minimum(xmin_ref[...], cur_min)
        xmax_ref[...] = jnp.maximum(xmax_ref[...], cur_max)

    @pl.when(bi == pl.num_programs(1) - 1)
    def _():
        new_rmin_ref[...] = (momentum * rmin_ref[...].astype(jnp.float32)
                             + (1.0 - momentum) * xmin_ref[...]
                             ).astype(new_rmin_ref.dtype)
        new_rmax_ref[...] = (momentum * rmax_ref[...].astype(jnp.float32)
                             + (1.0 - momentum) * xmax_ref[...]
                             ).astype(new_rmax_ref.dtype)


def _affine_kernel(x_ref, rmin_ref, out_ref):
    """out = rmin*(1-2x)+x == x*(1-2*rmin)+rmin  (eval branch / pass 2)."""
    x = x_ref[...].astype(jnp.float32)                        # (TILE_B, TILE_F)
    rmin = rmin_ref[...].astype(jnp.float32)                  # (1, TILE_F)
    coeff = 1.0 - 2.0 * rmin
    out_ref[...] = (x * coeff + rmin).astype(out_ref.dtype)


# ---------------------------------------------------------------------------
# Wrapper
# ---------------------------------------------------------------------------

def _affine_pointwise(x, rmin2d, vmem_limit, target_bytes):
    """2-D tiled pointwise pass (used by eval branch and training pass 2)."""
    B, F = x.shape
    isz = x.dtype.itemsize
    tile_b, tile_f = _pointwise_tiles(B, F, isz, target_bytes)
    grid = (pl.cdiv(B, tile_b), pl.cdiv(F, tile_f))
    x_spec = pl.BlockSpec((tile_b, tile_f), lambda i, j: (i, j))
    vec_spec = pl.BlockSpec((1, tile_f), lambda i, j: (0, j))
    return pl.pallas_call(
        _affine_kernel,
        out_shape=jax.ShapeDtypeStruct((B, F), x.dtype),
        grid=grid,
        in_specs=[x_spec, vec_spec],
        out_specs=x_spec,
        compiler_params=pltpu.CompilerParams(
            dimension_semantics=("parallel", "parallel"),
            vmem_limit_bytes=vmem_limit),
        cost_estimate=pl.CostEstimate(
            flops=int(2 * B * F), transcendentals=0,
            bytes_accessed=int(2 * B * F * isz + F * rmin2d.dtype.itemsize)),
    )(x, rmin2d)


def qc_norm_true(x, x_running_min, x_running_max=None, momentum=0.1,
                 training=True, force_two_pass=False, target_block_bytes=None):
    """Forward of QC_Norm_True.

    training=True:  returns (out (B,F), new_running_min (F,), new_running_max (F,))
    training=False: returns out (B,F)
    """
    B, F = x.shape
    isz = x.dtype.itemsize
    budget = _vmem_budget_bytes()
    target = int(target_block_bytes) if target_block_bytes else _target_block_bytes(budget)

    rmin2d = x_running_min.reshape(1, F)   # zero-cost lane-dense row

    if not training:
        return _affine_pointwise(x, rmin2d, budget, target)

    assert x_running_max is not None
    rmax2d = x_running_max.reshape(1, F)
    stat_isz = x_running_min.dtype.itemsize

    # Fused single-pass needs a full (B, TILE_F>=128) column double-buffered
    # (in + out). If that alone would blow the budget, go batch-chunked.
    two_pass = force_two_pass or (4 * B * 128 * isz > budget // 2)

    if not two_pass:
        tile_f = _train_tile_f(B, F, isz, target, budget)
        grid = (pl.cdiv(F, tile_f),)
        x_spec = pl.BlockSpec((B, tile_f), lambda i: (0, i))
        vec_spec = pl.BlockSpec((1, tile_f), lambda i: (0, i))
        out, new_rmin, new_rmax = pl.pallas_call(
            functools.partial(_train_fused_kernel, float(momentum)),
            out_shape=(
                jax.ShapeDtypeStruct((B, F), x.dtype),
                jax.ShapeDtypeStruct((1, F), x_running_min.dtype),
                jax.ShapeDtypeStruct((1, F), x_running_max.dtype),
            ),
            grid=grid,
            in_specs=[x_spec, vec_spec, vec_spec],
            out_specs=(x_spec, vec_spec, vec_spec),
            input_output_aliases={1: 1, 2: 2},   # running stats updated in place
            compiler_params=pltpu.CompilerParams(
                dimension_semantics=("parallel",),
                vmem_limit_bytes=budget),
            cost_estimate=pl.CostEstimate(
                flops=int(4 * B * F), transcendentals=0,
                bytes_accessed=int(2 * B * F * isz + 4 * F * stat_isz)),
        )(x, rmin2d, rmax2d)
        return out, new_rmin.reshape(F), new_rmax.reshape(F)

    # --- Two-pass batch-chunked training (bounded VMEM for huge B) ---------
    tile_b, tile_f = _pointwise_tiles(B, F, isz, target)
    grid = (pl.cdiv(F, tile_f), pl.cdiv(B, tile_b))   # batch (reduction) axis last
    x_spec = pl.BlockSpec((tile_b, tile_f), lambda fi, bi: (bi, fi))
    vec_spec = pl.BlockSpec((1, tile_f), lambda fi, bi: (0, fi))
    xmin, xmax, new_rmin, new_rmax = pl.pallas_call(
        functools.partial(_minmax_pass_kernel, float(momentum), B, tile_b),
        out_shape=(
            jax.ShapeDtypeStruct((1, F), jnp.float32),
            jax.ShapeDtypeStruct((1, F), jnp.float32),
            jax.ShapeDtypeStruct((1, F), x_running_min.dtype),
            jax.ShapeDtypeStruct((1, F), x_running_max.dtype),
        ),
        grid=grid,
        in_specs=[x_spec, vec_spec, vec_spec],
        out_specs=(vec_spec, vec_spec, vec_spec, vec_spec),
        compiler_params=pltpu.CompilerParams(
            dimension_semantics=("parallel", "arbitrary"),
            vmem_limit_bytes=budget),
        cost_estimate=pl.CostEstimate(
            flops=int(2 * B * F), transcendentals=0,
            bytes_accessed=int(B * F * isz + 4 * F * stat_isz + 2 * F * 4)),
    )(x, rmin2d, rmax2d)
    del xmax  # only needed inside pass 1 for the running-max update
    out = _affine_pointwise(x, xmin, budget, target)   # pass 2: one extra read of x
    return out, new_rmin.reshape(F), new_rmax.reshape(F)


# ---------------------------------------------------------------------------
# Pure-JAX reference + self-test
# ---------------------------------------------------------------------------

def _reference_train(x, rmin, rmax, momentum=0.1):
    x_min = jnp.min(x, axis=0)
    x_max = jnp.max(x, axis=0)
    new_rmin = momentum * rmin + (1.0 - momentum) * x_min
    new_rmax = momentum * rmax + (1.0 - momentum) * x_max
    out = x_min[None, :] * (1.0 - 2.0 * x) + x
    return out, new_rmin, new_rmax


if __name__ == "__main__":
    momentum = 0.1
    k0, k1 = jax.random.split(jax.random.PRNGKey(0))

    # Shapes consistent with the module: num_features=512, small batch.
    B, F = 8, 512
    x = jax.random.uniform(k0, (B, F), dtype=jnp.float32)
    running_min = jnp.zeros((F,), jnp.float32)
    running_max = jnp.zeros((F,), jnp.float32)

    ref_out, ref_rmin, ref_rmax = _reference_train(x, running_min, running_max, momentum)
    ref_eval = ref_rmin[None, :] * (1.0 - 2.0 * x) + x

    # Training branch (fused single-pass path).
    out, new_rmin, new_rmax = jax.block_until_ready(
        qc_norm_true(x, running_min, running_max, momentum=momentum, training=True))
    assert jnp.allclose(out, ref_out, atol=1e-5, rtol=1e-5)
    assert jnp.allclose(new_rmin, ref_rmin, atol=1e-5, rtol=1e-5)
    assert jnp.allclose(new_rmax, ref_rmax, atol=1e-5, rtol=1e-5)

    # Inference branch using the updated running stats (2-D tiled pointwise).
    out_eval = jax.block_until_ready(qc_norm_true(x, new_rmin, training=False))
    assert jnp.allclose(out_eval, ref_eval, atol=1e-5, rtol=1e-5)

    # Single-pass path with a ragged (non multiple-of-128) feature axis.
    B2, F2 = 16, 320
    x2 = jax.random.uniform(k1, (B2, F2), dtype=jnp.float32)
    rmin2 = jnp.zeros((F2,), jnp.float32)
    rmax2 = jnp.zeros((F2,), jnp.float32)
    ref2 = _reference_train(x2, rmin2, rmax2, momentum)
    got2 = jax.block_until_ready(
        qc_norm_true(x2, rmin2, rmax2, momentum=momentum, training=True))
    for g, r in zip(got2, ref2):
        assert jnp.allclose(g, r, atol=1e-5, rtol=1e-5)

    # Two-pass (batch-chunked) training path, forced with tiny blocks so the
    # ragged batch tile and the cross-chunk min/max accumulation are exercised.
    B3, F3 = 20, 256
    x3 = jax.random.uniform(jax.random.PRNGKey(3), (B3, F3), dtype=jnp.float32)
    rmin3 = jnp.zeros((F3,), jnp.float32)
    rmax3 = jnp.zeros((F3,), jnp.float32)
    ref3 = _reference_train(x3, rmin3, rmax3, momentum)
    got3 = jax.block_until_ready(
        qc_norm_true(x3, rmin3, rmax3, momentum=momentum, training=True,
                     force_two_pass=True, target_block_bytes=4096))
    for g, r in zip(got3, ref3):
        assert jnp.allclose(g, r, atol=1e-5, rtol=1e-5)

    print("KERNEL_OK")
</pallas_src>

<mosaic_0001>
module attributes {stable_mosaic.version = 11 : i64} {
  func.func @_train_fused_kernel(%arg0: i32, %arg1: memref<8x256xf32, #tpu.memory_space<vmem>>, %arg2: memref<1x256xf32, #tpu.memory_space<vmem>>, %arg3: memref<1x256xf32, #tpu.memory_space<vmem>>, %arg4: memref<8x256xf32, #tpu.memory_space<vmem>>, %arg5: memref<1x256xf32, #tpu.memory_space<vmem>>, %arg6: memref<1x256xf32, #tpu.memory_space<vmem>>) attributes {dimension_semantics = [#tpu.dimension_semantics<parallel>], iteration_bounds = array<i64: 2>, scalar_prefetch = 0 : i64, scratch_operands = 0 : i64, tpu.core_type = #tpu.core_type<tc>, window_params = [{transform_indices = @transform_0, window_bounds = array<i64: 8, 256>}, {transform_indices = @transform_1, window_bounds = array<i64: 1, 256>}, {transform_indices = @transform_2, window_bounds = array<i64: 1, 256>}, {transform_indices = @transform_3, window_bounds = array<i64: 8, 256>}, {transform_indices = @transform_4, window_bounds = array<i64: 1, 256>}, {transform_indices = @transform_5, window_bounds = array<i64: 1, 256>}]} {
    %c0 = arith.constant 0 : index
    %c0_0 = arith.constant 0 : index
    %0 = vector.load %arg1[%c0, %c0_0] : memref<8x256xf32, #tpu.memory_space<vmem>>, vector<8x256xf32>
    %cst = arith.constant dense<0x7F800000> : vector<256xf32>
    %1 = vector.multi_reduction <minimumf>, %0, %cst [0] : vector<8x256xf32> to vector<256xf32>
    %2 = vector.shape_cast %1 : vector<256xf32> to vector<1x256xf32>
    %cst_1 = arith.constant dense<0xFF800000> : vector<256xf32>
    %3 = vector.multi_reduction <maximumf>, %0, %cst_1 [0] : vector<8x256xf32> to vector<256xf32>
    %4 = vector.shape_cast %3 : vector<256xf32> to vector<1x256xf32>
    %cst_2 = arith.constant 2.000000e+00 : f32
    %5 = vector.broadcast %cst_2 : f32 to vector<1x256xf32>
    %6 = arith.mulf %5, %2 : vector<1x256xf32>
    %cst_3 = arith.constant 1.000000e+00 : f32
    %7 = vector.broadcast %cst_3 : f32 to vector<1x256xf32>
    %8 = arith.subf %7, %6 : vector<1x256xf32>
    %9 = vector.broadcast %8 : vector<1x256xf32> to vector<8x256xf32>
    %10 = arith.mulf %0, %9 : vector<8x256xf32>
    %11 = vector.broadcast %2 : vector<1x256xf32> to vector<8x256xf32>
    %12 = arith.addf %10, %11 : vector<8x256xf32>
    %c0_4 = arith.constant 0 : index
    %c0_5 = arith.constant 0 : index
    %13 = vector.load %arg4[%c0_4, %c0_5] : memref<8x256xf32, #tpu.memory_space<vmem>>, vector<8x256xf32>
    tpu.vector_store %arg4[%c0_4, %c0_5], %12 {strides = array<i32>} : memref<8x256xf32, #tpu.memory_space<vmem>>, vector<8x256xf32>,
    %c0_6 = arith.constant 0 : index
    %c0_7 = arith.constant 0 : index
    %14 = vector.load %arg2[%c0_6, %c0_7] : memref<1x256xf32, #tpu.memory_space<vmem>>, vector<1x256xf32>
    %cst_8 = arith.constant 1.000000e-01 : f32
    %15 = vector.broadcast %cst_8 : f32 to vector<1x256xf32>
    %16 = arith.mulf %15, %14 : vector<1x256xf32>
    %cst_9 = arith.constant 0.899999976 : f32
    %17 = vector.broadcast %cst_9 : f32 to vector<1x256xf32>
    %18 = arith.mulf %17, %2 : vector<1x256xf32>
    %19 = arith.addf %16, %18 : vector<1x256xf32>
    %c0_10 = arith.constant 0 : index
    %c0_11 = arith.constant 0 : index
    %20 = vector.load %arg5[%c0_10, %c0_11] : memref<1x256xf32, #tpu.memory_space<vmem>>, vector<1x256xf32>
    tpu.vector_store %arg5[%c0_10, %c0_11], %19 {strides = array<i32>} : memref<1x256xf32, #tpu.memory_space<vmem>>, vector<1x256xf32>,
    %c0_12 = arith.constant 0 : index
    %c0_13 = arith.constant 0 : index
    %21 = vector.load %arg3[%c0_12, %c0_13] : memref<1x256xf32, #tpu.memory_space<vmem>>, vector<1x256xf32>
    %cst_14 = arith.constant 1.000000e-01 : f32
    %22 = vector.broadcast %cst_14 : f32 to vector<1x256xf32>
    %23 = arith.mulf %22, %21 : vector<1x256xf32>
    %cst_15 = arith.constant 0.899999976 : f32
    %24 = vector.broadcast %cst_15 : f32 to vector<1x256xf32>
    %25 = arith.mulf %24, %4 : vector<1x256xf32>
    %26 = arith.addf %23, %25 : vector<1x256xf32>
    %c0_16 = arith.constant 0 : index
    %c0_17 = arith.constant 0 : index
    %27 = vector.load %arg6[%c0_16, %c0_17] : memref<1x256xf32, #tpu.memory_space<vmem>>, vector<1x256xf32>
    tpu.vector_store %arg6[%c0_16, %c0_17], %26 {strides = array<i32>} : memref<1x256xf32, #tpu.memory_space<vmem>>, vector<1x256xf32>,
    return
  }
  func.func @transform_0(%arg0: i32) -> (i32, i32) {
    %c0_i32 = arith.constant 0 : i32
    %c0_i32_0 = arith.constant 0 : i32
    return %c0_i32, %arg0 : i32, i32
  }
  func.func @transform_1(%arg0: i32) -> (i32, i32) {
    %c0_i32 = arith.constant 0 : i32
    %c0_i32_0 = arith.constant 0 : i32
    return %c0_i32, %arg0 : i32, i32
  }
  func.func @transform_2(%arg0: i32) -> (i32, i32) {
    %c0_i32 = arith.constant 0 : i32
    %c0_i32_0 = arith.constant 0 : i32
    return %c0_i32, %arg0 : i32, i32
  }
  func.func @transform_3(%arg0: i32) -> (i32, i32) {
    %c0_i32 = arith.constant 0 : i32
    %c0_i32_0 = arith.constant 0 : i32
    return %c0_i32, %arg0 : i32, i32
  }
  func.func @transform_4(%arg0: i32) -> (i32, i32) {
    %c0_i32 = arith.constant 0 : i32
    %c0_i32_0 = arith.constant 0 : i32
    return %c0_i32, %arg0 : i32, i32
  }
  func.func @transform_5(%arg0: i32) -> (i32, i32) {
    %c0_i32 = arith.constant 0 : i32
    %c0_i32_0 = arith.constant 0 : i32
    return %c0_i32, %arg0 : i32, i32
  }
}

</mosaic_0001>

<llo_original>
// kernel: tpu_custom_call.1
$region0: #{tpu_custom_call.1}
  #allocation0 [shape = 'u32[]', space=smem, size = 0x4, offset = 0x4, fixed_abs, tag = 'smem constant byte address 0x4 - core index']
  #allocation1 [shape = 'u32[144,128]{1,0:T(1,128)}', space=vmem, size = 0x12000, scoped, tag = 'internal scratch']
  %s0 = inlined_call_operand.hbm [shape: f32[8,512], index: 0, kind: input, shape index: {}]
  %s1 = inlined_call_operand.hbm [shape: f32[1,512], index: 1, kind: input, shape index: {}, may-alias: {1,4}]
  %s2 = inlined_call_operand.hbm [shape: f32[1,512], index: 2, kind: input, shape index: {}, may-alias: {2,5}]
  %s3 = inlined_call_operand.hbm [shape: f32[8,512], index: 3, kind: output, shape index: {0}]
  %s4 = inlined_call_operand.hbm [shape: f32[1,512], index: 4, kind: output, shape index: {1}, may-alias: {1,4}]
  %s5 = inlined_call_operand.hbm [shape: f32[1,512], index: 5, kind: output, shape index: {2}, may-alias: {2,5}]
  %6 = xla_tuple %s3, %s4, %s5
  %s7 = sld [smem:[#allocation0]]
  $region73: #{tpu_custom_call.1} parent=0
    _
  %s9 = ssub.s32 1, %s7
  %s10 = scalar_select 0, %s9, %s7
  $region1: #{tpu_custom_call.1} parent=0
    #allocation2 [shape = 'u8[16384]{0}', space=vmem, size = 0x4000, scoped, tag = 'input window, operand 0']
    #allocation3 [shape = 's32[2]{0}', space=sflag, size = 0x8, scoped, tag = 'scoped memory for tpu_custom_call.1']
    #allocation4 [shape = 's32[2]{0}', space=sflag, size = 0x8, scoped, tag = 'scoped memory for tpu_custom_call.1']
    #allocation5 [shape = 'u8[2048]{0}', space=vmem, size = 0x800, scoped, tag = 'input window, operand 1']
    #allocation6 [shape = 's32[2]{0}', space=sflag, size = 0x8, scoped, tag = 'scoped memory for tpu_custom_call.1']
    #allocation7 [shape = 'u8[2048]{0}', space=vmem, size = 0x800, scoped, tag = 'input window, operand 2']
    #allocation8 [shape = 'u8[16384]{0}', space=vmem, size = 0x4000, scoped, tag = 'output window, operand 0']
    #allocation9 [shape = 'u8[2048]{0}', space=vmem, size = 0x800, scoped, tag = 'output window, operand 1']
    #allocation10 [shape = 's32[2]{0}', space=sflag, size = 0x8, scoped, tag = 'scoped memory for tpu_custom_call.1']
    #allocation11 [shape = 'u8[2048]{0}', space=vmem, size = 0x800, scoped, tag = 'output window, operand 2']
    %11 = vsyncpa [#allocation3], 0
    %s12 = scalar_lea.sflag [#allocation3], 1
    %13 = vsyncpa %s12, 0
    %14 = vsyncpa [#allocation6], 0
    %s15 = scalar_lea.sflag [#allocation6], 1
    %16 = vsyncpa %s15, 0
    %17 = vsyncpa [#allocation4], 0
    %s18 = scalar_lea.sflag [#allocation4], 1
    %19 = vsyncpa %s18, 0
    %20 = vsyncpa [#allocation10], 0
    %s21 = scalar_lea.sflag [#allocation10], 1
    %22 = vsyncpa %s21, 0
    loop: start=0, step=1, limit=4
    $region2: #{tpu_custom_call.1} parent=1 // loop_pre_header
      _
    $region3: #{tpu_custom_call.1} parent=1 // loop_header
      %s24 = sphi 0, %s28
      %p25 = scmp.ge.s32.totalorder %s24, 4
      %s34 = sphi 0, %s36
      %s37 = sphi 0, %s34
      %s38 = sphi 0, %s37
      %s54 = sphi 0, %s38
      %s60 = sphi 0, %s62
      %s63 = sphi 0, %s60
      %s64 = sphi 0, %s63
      %s80 = sphi 0, %s64
      %s86 = sphi 0, %s88
      %s89 = sphi 0, %s86
      %s90 = sphi 0, %s89
      %s106 = sphi 0, %s90
      %s112 = sphi 0, %s114
      %s115 = sphi 0, %s112
      %s116 = sphi 0, %s115
      %s132 = sphi 0, %s116
      %s138 = sphi 0, %s140
      %s141 = sphi 0, %s138
      %s142 = sphi 0, %s141
      %s158 = sphi 0, %s142
      %s164 = sphi 0, %s166
      %s167 = sphi 0, %s164
      %s168 = sphi 0, %s167
      %s184 = sphi 0, %s168
    $region4: #{tpu_custom_call.1} parent=1 // loop_header_branch
      %27 = sbr.rel (%p25) target = $region8
    $region5: #{tpu_custom_call.1} parent=1 // loop_body
      %s29 = ssub.s32 %s24, 1
      %s30 = ssub.s32 %s24, 2
      %s31 = sadd.s32 %s24, 1
      %s32 = ssub.s32 %s24, %s31
      %p33 = scmp.eq.s32.totalorder %s32, 0
      %s35 = sadd.s32 %s34, 1
      %s36 = scalar_select %p33, %s34, %s35
      %p39 = pneg %p33
      %p40 = scmp.eq.s32.totalorder %s24, 1
      %p41 = por %p39, %p40
      %p42 = scmp.ne.s32.totalorder %s34, %s37
      %p43 = scmp.eq.s32.totalorder %s24, 0
      %p44 = por %p42, %p43
      %p45 = scmp.ne.s32.totalorder %s34, %s37
      %p46 = scmp.eq.s32.totalorder %s29, 1
      %p47 = por %p45, %p46
      %p48 = scmp.ne.s32.totalorder %s37, %s38
      %p49 = scmp.eq.s32.totalorder %s29, 0
      %p50 = por %p48, %p49
      %p51 = scmp.ne.s32.totalorder %s37, %s38
      %p52 = scmp.eq.s32.totalorder %s30, 1
      %p53 = por %p51, %p52
      %p55 = scmp.ne.s32.totalorder %s38, %s54
      %p56 = scmp.eq.s32.totalorder %s30, 0
      %p57 = por %p55, %p56
      %s58 = ssub.s32 %s24, %s31
      %p59 = scmp.eq.s32.totalorder %s58, 0
      %s61 = sadd.s32 %s60, 1
      %s62 = scalar_select %p59, %s60, %s61
      %p65 = pneg %p59
      %p66 = scmp.eq.s32.totalorder %s24, 1
      %p67 = por %p65, %p66
      %p68 = scmp.ne.s32.totalorder %s60, %s63
      %p69 = scmp.eq.s32.totalorder %s24, 0
      %p70 = por %p68, %p69
      %p71 = scmp.ne.s32.totalorder %s60, %s63
      %p72 = scmp.eq.s32.totalorder %s29, 1
      %p73 = por %p71, %p72
      %p74 = scmp.ne.s32.totalorder %s63, %s64
      %p75 = scmp.eq.s32.totalorder %s29, 0
      %p76 = por %p74, %p75
      %p77 = scmp.ne.s32.totalorder %s63, %s64
      %p78 = scmp.eq.s32.totalorder %s30, 1
      %p79 = por %p77, %p78
      %p81 = scmp.ne.s32.totalorder %s64, %s80
      %p82 = scmp.eq.s32.totalorder %s30, 0
      %p83 = por %p81, %p82
      %s84 = ssub.s32 %s24, %s31
      %p85 = scmp.eq.s32.totalorder %s84, 0
      %s87 = sadd.s32 %s86, 1
      %s88 = scalar_select %p85, %s86, %s87
      %p91 = pneg %p85
      %p92 = scmp.eq.s32.totalorder %s24, 1
      %p93 = por %p91, %p92
      %p94 = scmp.ne.s32.totalorder %s86, %s89
      %p95 = scmp.eq.s32.totalorder %s24, 0
      %p96 = por %p94, %p95
      %p97 = scmp.ne.s32.totalorder %s86, %s89
      %p98 = scmp.eq.s32.totalorder %s29, 1
      %p99 = por %p97, %p98
      %p100 = scmp.ne.s32.totalorder %s89, %s90
      %p101 = scmp.eq.s32.totalorder %s29, 0
      %p102 = por %p100, %p101
      %p103 = scmp.ne.s32.totalorder %s89, %s90
      %p104 = scmp.eq.s32.totalorder %s30, 1
      %p105 = por %p103, %p104
      %p107 = scmp.ne.s32.totalorder %s90, %s106
      %p108 = scmp.eq.s32.totalorder %s30, 0
      %p109 = por %p107, %p108
      %s110 = ssub.s32 %s24, %s31
      %p111 = scmp.eq.s32.totalorder %s110, 0
      %s113 = sadd.s32 %s112, 1
      %s114 = scalar_select %p111, %s112, %s113
      %p117 = pneg %p111
      %p118 = scmp.eq.s32.totalorder %s24, 1
      %p119 = por %p117, %p118
      %p120 = scmp.ne.s32.totalorder %s112, %s115
      %p121 = scmp.eq.s32.totalorder %s24, 0
      %p122 = por %p120, %p121
      %p123 = scmp.ne.s32.totalorder %s112, %s115
      %p124 = scmp.eq.s32.totalorder %s29, 1
      %p125 = por %p123, %p124
      %p126 = scmp.ne.s32.totalorder %s115, %s116
      %p127 = scmp.eq.s32.totalorder %s29, 0
      %p128 = por %p126, %p127
      %p129 = scmp.ne.s32.totalorder %s115, %s116
      %p130 = scmp.eq.s32.totalorder %s30, 1
      %p131 = por %p129, %p130
      %p133 = scmp.ne.s32.totalorder %s116, %s132
      %p134 = scmp.eq.s32.totalorder %s30, 0
      %p135 = por %p133, %p134
      %s136 = ssub.s32 %s24, %s31
      %p137 = scmp.eq.s32.totalorder %s136, 0
      %s139 = sadd.s32 %s138, 1
      %s140 = scalar_select %p137, %s138, %s139
      %p143 = pneg %p137
      %p144 = scmp.eq.s32.totalorder %s24, 1
      %p145 = por %p143, %p144
      %p146 = scmp.ne.s32.totalorder %s138, %s141
      %p147 = scmp.eq.s32.totalorder %s24, 0
      %p148 = por %p146, %p147
      %p149 = scmp.ne.s32.totalorder %s138, %s141
      %p150 = scmp.eq.s32.totalorder %s29, 1
      %p151 = por %p149, %p150
      %p152 = scmp.ne.s32.totalorder %s141, %s142
      %p153 = scmp.eq.s32.totalorder %s29, 0
      %p154 = por %p152, %p153
      %p155 = scmp.ne.s32.totalorder %s141, %s142
      %p156 = scmp.eq.s32.totalorder %s30, 1
      %p157 = por %p155, %p156
      %p159 = scmp.ne.s32.totalorder %s142, %s158
      %p160 = scmp.eq.s32.totalorder %s30, 0
      %p161 = por %p159, %p160
      %s162 = ssub.s32 %s24, %s31
      %p163 = scmp.eq.s32.totalorder %s162, 0
      %s165 = sadd.s32 %s164, 1
      %s166 = scalar_select %p163, %s164, %s165
      %p169 = pneg %p163
      %p170 = scmp.eq.s32.totalorder %s24, 1
      %p171 = por %p169, %p170
      %p172 = scmp.ne.s32.totalorder %s164, %s167
      %p173 = scmp.eq.s32.totalorder %s24, 0
      %p174 = por %p172, %p173
      %p175 = scmp.ne.s32.totalorder %s164, %s167
      %p176 = scmp.eq.s32.totalorder %s29, 1
      %p177 = por %p175, %p176
      %p178 = scmp.ne.s32.totalorder %s167, %s168
      %p179 = scmp.eq.s32.totalorder %s29, 0
      %p180 = por %p178, %p179
      %p181 = scmp.ne.s32.totalorder %s167, %s168
      %p182 = scmp.eq.s32.totalorder %s30, 1
      %p183 = por %p181, %p182
      %p185 = scmp.ne.s32.totalorder %s168, %s184
      %p186 = scmp.eq.s32.totalorder %s30, 0
      %p187 = por %p185, %p186
      %p188 = scmp.le.s32.totalorder 1, %s24
      %p189 = scmp.lt.s32.totalorder %s24, 3
      %p190 = pnand %p188, %p189
      %p191 = pneg %p190
      // Predicated region
      $region9: #{tpu_custom_call.1} parent=5 // pred_check
        _
      $region10: #{tpu_custom_call.1} parent=5 // pred_check_branch
        %193 = sbr.rel (%p190) target = $region12
      $region11: #{tpu_custom_call.1} parent=5 // pred_region
        %s194 = ssub.s32 %s24, 1
      $region12: #{tpu_custom_call.1} parent=5 // pred_fallthru
        _
      %p195 = scmp.lt.s32.totalorder %s24, 2
      // Predicated region
      $region13: #{tpu_custom_call.1} parent=5 // pred_check
        %p196 = pneg %p195
      $region14: #{tpu_custom_call.1} parent=5 // pred_check_branch
        %198 = sbr.rel (%p196) target = $region16
      $region15: #{tpu_custom_call.1} parent=5 // pred_region
        // Predicated region
        $region17: #{tpu_custom_call.1} parent=15 // pred_check
          %p199 = pneg %p44
        $region18: #{tpu_custom_call.1} parent=15 // pred_check_branch
          %201 = sbr.rel (%p199) target = $region20
        $region19: #{tpu_custom_call.1} parent=15 // pred_region
          %s202 = sand.u32 %s34, 1
          %s203 = scalar_lea.sflag [#allocation3], %s202
          %s204 = sand.u32 %s34, 1
          %s205 = smul.addr %s204, 16
          %s206 = scalar_lea.vmem [#allocation2], %s205
          %s207 = smul.u32 2, %s24
          %s209 = ssub.s32 256, 256
          %210 = vsyncadd %s203, %s209
          %s211 = smul.addr %s207, 128
          %s212 = scalar_lea.hbm %s0, %s211
          %s214 = sshll.u32 %s206, 4
          %s215 = int_to_ptr.vmem [resolvable:$true] %s214
          %217 = dma.hbm_to_vmem [thread:$0]  %s212, 256, %s215, %s203
        $region20: #{tpu_custom_call.1} parent=15 // pred_fallthru
          _
        // Predicated region
        $region21: #{tpu_custom_call.1} parent=15 // pred_check
          %p218 = pneg %p70
        $region22: #{tpu_custom_call.1} parent=15 // pred_check_branch
          %220 = sbr.rel (%p218) target = $region24
        $region23: #{tpu_custom_call.1} parent=15 // pred_region
          %s221 = sand.u32 %s24, 1
          %s222 = scalar_lea.sflag [#allocation6], %s221
          %s223 = sand.u32 %s60, 1
          %s224 = smul.addr %s223, 2
          %s225 = scalar_lea.vmem [#allocation5], %s224
          %s226 = smul.u32 2, %s24
          %s228 = ssub.s32 32, 32
          %229 = vsyncadd %s222, %s228
          %s230 = smul.addr %s226, 16
          %s231 = scalar_lea.hbm %s1, %s230
          %s233 = sshll.u32 %s225, 4
          %s234 = int_to_ptr.vmem [resolvable:$true] %s233
          %236 = dma.hbm_to_vmem [thread:$0]  %s231, 32, %s234, %s222
        $region24: #{tpu_custom_call.1} parent=15 // pred_fallthru
          _
        // Predicated region
        $region25: #{tpu_custom_call.1} parent=15 // pred_check
          %p237 = pneg %p96
        $region26: #{tpu_custom_call.1} parent=15 // pred_check_branch
          %239 = sbr.rel (%p237) target = $region28
        $region27: #{tpu_custom_call.1} parent=15 // pred_region
          %s240 = sand.u32 %s24, 1
          %s241 = scalar_lea.sflag [#allocation6], %s240
          %s242 = sand.u32 %s86, 1
          %s243 = smul.addr %s242, 2
          %s244 = scalar_lea.vmem [#allocation7], %s243
          %s245 = smul.u32 2, %s24
          %s247 = ssub.s32 32, 32
          %248 = vsyncadd %s241, %s247
          %s249 = smul.addr %s245, 16
          %s250 = scalar_lea.hbm %s2, %s249
          %s252 = sshll.u32 %s244, 4
          %s253 = int_to_ptr.vmem [resolvable:$true] %s252
          %255 = dma.hbm_to_vmem [thread:$0]  %s250, 32, %s253, %s241
        $region28: #{tpu_custom_call.1} parent=15 // pred_fallthru
          _
      $region16: #{tpu_custom_call.1} parent=5 // pred_fallthru
        _
      %p256 = scmp.le.s32.totalorder 1, %s24
      %p257 = scmp.lt.s32.totalorder %s24, 3
      %p258 = pnand %p256, %p257
      %p259 = pneg %p258
      // Predicated region
      $region29: #{tpu_custom_call.1} parent=5 // pred_check
        _
      $region30: #{tpu_custom_call.1} parent=5 // pred_check_branch
        %261 = sbr.rel (%p258) target = $region32
      $region31: #{tpu_custom_call.1} parent=5 // pred_region
        %s262 = ssub.s32 %s24, 1
        %s263 = sand.u32 %s37, 1
        %s264 = scalar_lea.sflag [#allocation3], %s263
        %s265 = sand.u32 %s37, 1
        %s266 = smul.addr %s265, 16
        %s267 = scalar_lea.vmem [#allocation2], %s266
        // Predicated region
        $region33: #{tpu_custom_call.1} parent=31 // pred_check
          %p268 = pneg %p50
        $region34: #{tpu_custom_call.1} parent=31 // pred_check_branch
          %270 = sbr.rel (%p268) target = $region36
        $region35: #{tpu_custom_call.1} parent=31 // pred_region
          %271 = dma.done %s264, 256
        $region36: #{tpu_custom_call.1} parent=31 // pred_fallthru
          _
        %s272 = sand.u32 %s29, 1
        %s273 = scalar_lea.sflag [#allocation6], %s272
        %s274 = sand.u32 %s63, 1
        %s275 = smul.addr %s274, 2
        %s276 = scalar_lea.vmem [#allocation5], %s275
        // Predicated region
        $region37: #{tpu_custom_call.1} parent=31 // pred_check
          %p277 = pneg %p76
        $region38: #{tpu_custom_call.1} parent=31 // pred_check_branch
          %279 = sbr.rel (%p277) target = $region40
        $region39: #{tpu_custom_call.1} parent=31 // pred_region
          %280 = dma.done %s273, 32
        $region40: #{tpu_custom_call.1} parent=31 // pred_fallthru
          _
        %s281 = sand.u32 %s29, 1
        %s282 = scalar_lea.sflag [#allocation6], %s281
        %s283 = sand.u32 %s89, 1
        %s284 = smul.addr %s283, 2
        %s285 = scalar_lea.vmem [#allocation7], %s284
        // Predicated region
        $region41: #{tpu_custom_call.1} parent=31 // pred_check
          %p286 = pneg %p102
        $region42: #{tpu_custom_call.1} parent=31 // pred_check_branch
          %288 = sbr.rel (%p286) target = $region44
        $region43: #{tpu_custom_call.1} parent=31 // pred_region
          %289 = dma.done %s282, 32
        $region44: #{tpu_custom_call.1} parent=31 // pred_fallthru
          _
        %s290 = sand.u32 %s37, 1
        %s291 = scalar_lea.sflag [#allocation3], %s290
        %s292 = sand.u32 %s37, 1
        %s293 = smul.addr %s292, 16
        %s294 = scalar_lea.vmem [#allocation2], %s293
        %p295 = pneg %p50
        %p296 = pneg %p47
        %s297 = sand.u32 %s29, 1
        %s298 = scalar_lea.sflag [#allocation6], %s297
        %s299 = sand.u32 %s63, 1
        %s300 = smul.addr %s299, 2
        %s301 = scalar_lea.vmem [#allocation5], %s300
        %p302 = pneg %p76
        %p303 = pneg %p73
        %s304 = sand.u32 %s29, 1
        %s305 = scalar_lea.sflag [#allocation6], %s304
        %s306 = sand.u32 %s89, 1
        %s307 = smul.addr %s306, 2
        %s308 = scalar_lea.vmem [#allocation7], %s307
        %p309 = pneg %p102
        %p310 = pneg %p99
        %p311 = pneg %p128
        %p312 = pneg %p125
        %s313 = sand.u32 %s115, 1
        %s314 = scalar_lea.sflag [#allocation4], %s313
        %s315 = sand.u32 %s115, 1
        %s316 = smul.addr %s315, 16
        %s317 = scalar_lea.vmem [#allocation8], %s316
        %p318 = pneg %p154
        %p319 = pneg %p151
        %s320 = sand.u32 %s29, 1
        %s321 = scalar_lea.sflag [#allocation10], %s320
        %s322 = sand.u32 %s141, 1
        %s323 = smul.addr %s322, 2
        %s324 = scalar_lea.vmem [#allocation9], %s323
        %p325 = pneg %p180
        %p326 = pneg %p177
        %s327 = sand.u32 %s29, 1
        %s328 = scalar_lea.sflag [#allocation10], %s327
        %s329 = sand.u32 %s167, 1
        %s330 = smul.addr %s329, 2
        %s331 = scalar_lea.vmem [#allocation11], %s330
        %s332 = smul.u32 2, %s29
        %s333 = smul.u32 2, %s29
        %s334 = smul.u32 2, %s29
        %s335 = smul.u32 2, %s29
        %s336 = smul.u32 2, %s29
        %s337 = smul.u32 2, %s29
        %v338 = vld [vmem:[%s267] sm:$0xff]
        %v339 = vld [vmem:[%s267 + $0x8] sm:$0xff]
        %v340 = vrot.slane %v338, 4
        %v341 = vmin.f32 %v338, %v340
        %v342 = vrot.slane %v341, 2
        %v343 = vmin.f32 %v341, %v342
        %v344 = vrot.slane %v343, 1
        %v345 = vmin.f32 %v343, %v344
        %v346 = vrot.slane %v339, 4
        %v347 = vmin.f32 %v339, %v346
        %v348 = vrot.slane %v347, 2
        %v349 = vmin.f32 %v347, %v348
        %v350 = vrot.slane %v349, 1
        %v351 = vmin.f32 %v349, %v350
        %v352 = vrot.slane %v338, 4
        %v353 = vmax.f32 %v338, %v352
        %v354 = vrot.slane %v353, 2
        %v355 = vmax.f32 %v353, %v354
        %v356 = vrot.slane %v355, 1
        %v357 = vmax.f32 %v355, %v356
        %v358 = vrot.slane %v339, 4
        %v359 = vmax.f32 %v339, %v358
        %v360 = vrot.slane %v359, 2
        %v361 = vmax.f32 %v359, %v360
        %v362 = vrot.slane %v361, 1
        %v363 = vmax.f32 %v361, %v362
        %v364 = vmul.f32 %v345, 2.0
        %v365 = vmul.f32 %v351, 2.0
        %v366 = vsub.f32 1.0, %v364
        %v367 = vsub.f32 1.0, %v365
        %v368 = vmul.f32 %v338, %v366
        %v369 = vmul.f32 %v339, %v367
        %v370 = vadd.f32 %v368, %v345
        %v371 = vadd.f32 %v369, %v351
        %372 = vst [vmem:[%s317] sm:$0xff] %v370
        %373 = vst [vmem:[%s317 + $0x8] sm:$0xff] %v371
        %v374 = vld [vmem:[%s276] sm:$0x3]
        %v375 = vmul.f32 %v374, 0.1
        %v376 = vmul.f32 %v345, 0.9
        %v377 = vmul.f32 %v351, 0.9
        %v380 = vcombine.low %v376, %v377
        %v382 = vunpack.c.l.s4 1966171168
        %v383 = vunpack.c.0.s8 %v382
        %v384 = vlaneseq
        %v385 = vshrl.u32 %v384, 7
        %v386 = vsub.s32 %v383, %v385
        %v387 = vrot.slane %v380, %v386
        %v389 = vunpack.c.l.s4 1966171168
        %v390 = vunpack.c.0.s8 %v389
        %v391 = vlaneseq
        %v392 = vshrl.u32 %v391, 7
        %v393 = vsub.s32 %v390, %v392
        %v394 = vrot.slane %v387, %v393
        %v396 = vadd.f32 %v375, %v394
        %v397 = vlaneseq
        %vm398 = vcmp.ge.s32.totalorder %v397, 0
        %vm399 = vcmp.lt.s32.totalorder %v397, 256
        %vm400 = vmand %vm398, %vm399
        %401 = vst.msk [vmem:[%s324] sm:$0x3] %vm400, %v396
        %v402 = vld [vmem:[%s285] sm:$0x3]
        %v403 = vmul.f32 %v402, 0.1
        %v404 = vmul.f32 %v357, 0.9
        %v405 = vmul.f32 %v363, 0.9
        %v408 = vcombine.low %v404, %v405
        %v410 = vunpack.c.l.s4 1966171168
        %v411 = vunpack.c.0.s8 %v410
        %v412 = vlaneseq
        %v413 = vshrl.u32 %v412, 7
        %v414 = vsub.s32 %v411, %v413
        %v415 = vrot.slane %v408, %v414
        %v417 = vunpack.c.l.s4 1966171168
        %v418 = vunpack.c.0.s8 %v417
        %v419 = vlaneseq
        %v420 = vshrl.u32 %v419, 7
        %v421 = vsub.s32 %v418, %v420
        %v422 = vrot.slane %v415, %v421
        %v424 = vadd.f32 %v403, %v422
        %425 = vst.msk [vmem:[%s331] sm:$0x3] %vm400, %v424
        %s426 = sand.u32 %s115, 1
        %s427 = scalar_lea.sflag [#allocation4], %s426
        %s428 = sand.u32 %s115, 1
        %s429 = smul.addr %s428, 16
        %s430 = scalar_lea.vmem [#allocation8], %s429
        %s431 = sand.u32 %s29, 1
        %s432 = scalar_lea.sflag [#allocation10], %s431
        %s433 = sand.u32 %s141, 1
        %s434 = smul.addr %s433, 2
        %s435 = scalar_lea.vmem [#allocation9], %s434
        %s436 = sand.u32 %s29, 1
        %s437 = scalar_lea.sflag [#allocation10], %s436
        %s438 = sand.u32 %s167, 1
        %s439 = smul.addr %s438, 2
        %s440 = scalar_lea.vmem [#allocation11], %s439
        // Predicated region
        $region45: #{tpu_custom_call.1} parent=31 // pred_check
          %p441 = pneg %p125
        $region46: #{tpu_custom_call.1} parent=31 // pred_check_branch
          %443 = sbr.rel (%p441) target = $region48
        $region47: #{tpu_custom_call.1} parent=31 // pred_region
          %s444 = smul.u32 2, %s29
          %s446 = ssub.s32 256, 256
          %447 = vsyncadd %s427, %s446
          %s448 = smul.addr %s444, 128
          %s449 = scalar_lea.hbm %s3, %s448
          %s451 = sshll.u32 %s430, 4
          %s452 = int_to_ptr.vmem [resolvable:$true] %s451
          %454 = dma.vmem_to_hbm [thread:$0]  %s452, 256, %s449, %s427
        $region48: #{tpu_custom_call.1} parent=31 // pred_fallthru
          _
        // Predicated region
        $region49: #{tpu_custom_call.1} parent=31 // pred_check
          %p455 = pneg %p151
        $region50: #{tpu_custom_call.1} parent=31 // pred_check_branch
          %457 = sbr.rel (%p455) target = $region52
        $region51: #{tpu_custom_call.1} parent=31 // pred_region
          %s458 = smul.u32 2, %s29
          %s460 = ssub.s32 32, 32
          %461 = vsyncadd %s432, %s460
          %s462 = smul.addr %s458, 16
          %s463 = scalar_lea.hbm %s4, %s462
          %s465 = sshll.u32 %s435, 4
          %s466 = int_to_ptr.vmem [resolvable:$true] %s465
          %468 = dma.vmem_to_hbm [thread:$0]  %s466, 32, %s463, %s432
        $region52: #{tpu_custom_call.1} parent=31 // pred_fallthru
          _
        // Predicated region
        $region53: #{tpu_custom_call.1} parent=31 // pred_check
          %p469 = pneg %p177
        $region54: #{tpu_custom_call.1} parent=31 // pred_check_branch
          %471 = sbr.rel (%p469) target = $region56
        $region55: #{tpu_custom_call.1} parent=31 // pred_region
          %s472 = smul.u32 2, %s29
          %s474 = ssub.s32 32, 32
          %475 = vsyncadd %s437, %s474
          %s476 = smul.addr %s472, 16
          %s477 = scalar_lea.hbm %s5, %s476
          %s479 = sshll.u32 %s440, 4
          %s480 = int_to_ptr.vmem [resolvable:$true] %s479
          %482 = dma.vmem_to_hbm [thread:$0]  %s480, 32, %s477, %s437
        $region56: #{tpu_custom_call.1} parent=31 // pred_fallthru
          _
      $region32: #{tpu_custom_call.1} parent=5 // pred_fallthru
        _
      %p483 = scmp.le.s32.totalorder 2, %s24
      // Predicated region
      $region57: #{tpu_custom_call.1} parent=5 // pred_check
        %p484 = pneg %p483
      $region58: #{tpu_custom_call.1} parent=5 // pred_check_branch
        %486 = sbr.rel (%p484) target = $region60
      $region59: #{tpu_custom_call.1} parent=5 // pred_region
        %s487 = ssub.s32 %s24, 2
        // Predicated region
        $region61: #{tpu_custom_call.1} parent=59 // pred_check
          %p488 = pneg %p131
        $region62: #{tpu_custom_call.1} parent=59 // pred_check_branch
          %490 = sbr.rel (%p488) target = $region64
        $region63: #{tpu_custom_call.1} parent=59 // pred_region
          %s491 = sand.u32 %s116, 1
          %s492 = scalar_lea.sflag [#allocation4], %s491
          %s493 = sand.u32 %s116, 1
          %s494 = smul.addr %s493, 16
          %s495 = scalar_lea.vmem [#allocation8], %s494
          %496 = dma.done %s492, 256
        $region64: #{tpu_custom_call.1} parent=59 // pred_fallthru
          _
        // Predicated region
        $region65: #{tpu_custom_call.1} parent=59 // pred_check
          %p497 = pneg %p157
        $region66: #{tpu_custom_call.1} parent=59 // pred_check_branch
          %499 = sbr.rel (%p497) target = $region68
        $region67: #{tpu_custom_call.1} parent=59 // pred_region
          %s500 = sand.u32 %s30, 1
          %s501 = scalar_lea.sflag [#allocation10], %s500
          %s502 = sand.u32 %s142, 1
          %s503 = smul.addr %s502, 2
          %s504 = scalar_lea.vmem [#allocation9], %s503
          %505 = dma.done %s501, 32
        $region68: #{tpu_custom_call.1} parent=59 // pred_fallthru
          _
        // Predicated region
        $region69: #{tpu_custom_call.1} parent=59 // pred_check
          %p506 = pneg %p183
        $region70: #{tpu_custom_call.1} parent=59 // pred_check_branch
          %508 = sbr.rel (%p506) target = $region72
        $region71: #{tpu_custom_call.1} parent=59 // pred_region
          %s509 = sand.u32 %s30, 1
          %s510 = scalar_lea.sflag [#allocation10], %s509
          %s511 = sand.u32 %s168, 1
          %s512 = smul.addr %s511, 2
          %s513 = scalar_lea.vmem [#allocation11], %s512
          %514 = dma.done %s510, 32
        $region72: #{tpu_custom_call.1} parent=59 // pred_fallthru
          _
      $region60: #{tpu_custom_call.1} parent=5 // pred_fallthru
        _
    $region6: #{tpu_custom_call.1} parent=1 // loop_footer
      %s28 = sadd.s32 1, %s24
    $region7: #{tpu_custom_call.1} parent=1 // loop_footer_branch
      %23 = sbr.rel target = $region3
    $region8: #{tpu_custom_call.1} parent=1 // loop_exit
      _
    %515 = vsyncpa [#allocation3], 1
    %s516 = scalar_lea.sflag [#allocation3], 1
    %517 = vsyncpa %s516, 1
    %518 = vsyncpa [#allocation6], 1
    %s519 = scalar_lea.sflag [#allocation6], 1
    %520 = vsyncpa %s519, 1
    %521 = vsyncpa [#allocation4], 1
    %s522 = scalar_lea.sflag [#allocation4], 1
    %523 = vsyncpa %s522, 1
    %524 = vsyncpa [#allocation10], 1
    %s525 = scalar_lea.sflag [#allocation10], 1
    %526 = vsyncpa %s525, 1

</llo_original>
